<compile_context>
chip_gen: v7x
topology: tpu7x:2x2x1
jax: 0.10.0
libtpu: 0.0.40
codegen_flags: <defaults>
</compile_context>

<pallas_src>
import jax
import jax.numpy as jnp
from jax.experimental import pallas as pl
from jax.experimental.pallas import tpu as pltpu


def _linear_state_update_kernel(x_ref, u_ref, w_ref, o_ref):
    # Fuse the two linear maps: dx = [x | u] @ W_cat, single MXU matmul with a
    # single f32 accumulator -> one result drain, one cast, one store.
    xu = jnp.concatenate([x_ref[...], u_ref[...]], axis=-1)  # (batch, n_x + n_u)
    acc = jnp.dot(xu, w_ref[...], preferred_element_type=jnp.float32)
    o_ref[...] = acc.astype(o_ref.dtype)


def pack_weights(A_weight, B_weight):
    """Pre-transpose + pack the (static) weights ONCE at parameter-init time.

    A_weight: (n_x, n_x), B_weight: (n_x, n_u)  (PyTorch nn.Linear layout)
    Returns W_cat: (n_x + n_u, n_x) with dx = [x | u] @ W_cat.
    """
    return jnp.concatenate([A_weight.T, B_weight.T], axis=0)


def linear_state_update(x, u, w_cat):
    """x: (batch, n_x), u: (batch, n_u), w_cat: (n_x + n_u, n_x) from pack_weights."""
    batch, n_x = x.shape
    vmem = pltpu.MemorySpace.VMEM
    return pl.pallas_call(
        _linear_state_update_kernel,
        out_shape=jax.ShapeDtypeStruct((batch, n_x), x.dtype),
        # No grid: single invocation, whole arrays live in VMEM (total < 16 KiB),
        # so no pipeline/double-buffer machinery is generated.
        in_specs=[
            pl.BlockSpec(memory_space=vmem),  # x      (batch, n_x)
            pl.BlockSpec(memory_space=vmem),  # u      (batch, n_u)
            pl.BlockSpec(memory_space=vmem),  # W_cat  (n_x + n_u, n_x)
        ],
        out_specs=pl.BlockSpec(memory_space=vmem),
    )(x, u, w_cat)


if __name__ == "__main__":
    # Small shapes consistent with the module: batch=8, n_x=32, n_u=16.
    batch, n_x, n_u = 8, 32, 16

    key = jax.random.PRNGKey(0)
    k_x, k_u, k_a, k_b = jax.random.split(key, 4)

    x = jax.random.normal(k_x, (batch, n_x), dtype=jnp.float32)
    u = jax.random.normal(k_u, (batch, n_u), dtype=jnp.float32)

    # Deterministic parameter init mirroring nn.init.normal_(std=0.01),
    # in the PyTorch nn.Linear (out_features, in_features) layout.
    A_weight = 0.01 * jax.random.normal(k_a, (n_x, n_x), dtype=jnp.float32)
    B_weight = 0.01 * jax.random.normal(k_b, (n_x, n_u), dtype=jnp.float32)

    # One-time (init-time) weight transpose + pack — not a per-call cost.
    W_cat = pack_weights(A_weight, B_weight)  # (n_x + n_u, n_x)

    fwd = jax.jit(linear_state_update)
    dx = fwd(x, u, W_cat)
    dx = jax.block_until_ready(dx)

    # Pure-JAX reference check (module semantics: dx = A(x) + B(u)).
    dx_ref = x @ A_weight.T + u @ B_weight.T
    assert dx.shape == (batch, n_x)
    assert jnp.allclose(dx, dx_ref, atol=1e-5, rtol=1e-5), "mismatch vs reference"

    print("KERNEL_OK")
</pallas_src>

<mosaic_0001>
module attributes {stable_mosaic.version = 11 : i64} {
  func.func @_linear_state_update_kernel(%arg0: memref<8x32xf32, #tpu.memory_space<vmem>>, %arg1: memref<8x16xf32, #tpu.memory_space<vmem>>, %arg2: memref<48x32xf32, #tpu.memory_space<vmem>>, %arg3: memref<8x32xf32, #tpu.memory_space<vmem>>) attributes {dimension_semantics = [], scalar_prefetch = 0 : i64, scratch_operands = 0 : i64, tpu.core_type = #tpu.core_type<tc>} {
    %c0 = arith.constant 0 : index
    %c0_0 = arith.constant 0 : index
    %0 = vector.load %arg0[%c0, %c0_0] : memref<8x32xf32, #tpu.memory_space<vmem>>, vector<8x32xf32>
    %c0_1 = arith.constant 0 : index
    %c0_2 = arith.constant 0 : index
    %1 = vector.load %arg1[%c0_1, %c0_2] : memref<8x16xf32, #tpu.memory_space<vmem>>, vector<8x16xf32>
    %2 = tpu.concatenate %0, %1 in 1 : vector<8x32xf32>, vector<8x16xf32> -> vector<8x48xf32>
    %c0_3 = arith.constant 0 : index
    %c0_4 = arith.constant 0 : index
    %3 = vector.load %arg2[%c0_3, %c0_4] : memref<48x32xf32, #tpu.memory_space<vmem>>, vector<48x32xf32>
    %cst = arith.constant dense<0.000000e+00> : vector<8x32xf32>
    %4 = tpu.matmul %2, %3, %cst {dimension_numbers = #tpu.dot_dimension_numbers<[1], [0], [0], [1], [0, 0, 1, 1], [], []>} : vector<8x48xf32>, vector<48x32xf32>, vector<8x32xf32> -> vector<8x32xf32>
    %c0_5 = arith.constant 0 : index
    %c0_6 = arith.constant 0 : index
    %5 = vector.load %arg3[%c0_5, %c0_6] : memref<8x32xf32, #tpu.memory_space<vmem>>, vector<8x32xf32>
    tpu.vector_store %arg3[%c0_5, %c0_6], %4 {strides = array<i32>} : memref<8x32xf32, #tpu.memory_space<vmem>>, vector<8x32xf32>,
    return
  }
}

</mosaic_0001>

<llo_original>
// kernel: linear_state_update.1
$region0: #{linear_state_update.1}
  #allocation0 [shape = 'u32[]', space=smem, size = 0x4, offset = 0x4, fixed_abs, tag = 'smem constant byte address 0x4 - core index']
  #allocation1 [shape = 'u32[144,128]{1,0:T(1,128)}', space=vmem, size = 0x12000, scoped, tag = 'internal scratch']
  %s0 = inlined_call_operand.vmem [shape: f32[8,32], index: 0, kind: input, shape index: {}]
  %s1 = inlined_call_operand.vmem [shape: f32[8,16], index: 1, kind: input, shape index: {}]
  %s2 = inlined_call_operand.vmem [shape: f32[48,32], index: 2, kind: input, shape index: {}]
  %s3 = inlined_call_operand.hbm [shape: f32[8,32], index: 3, kind: output, shape index: {}]
  %s4 = sld [smem:[#allocation0]]
  $region22: #{linear_state_update.1} parent=0
    _
  %s6 = ssub.s32 1, %s4
  %s7 = scalar_select 0, %s6, %s4
  $region1: #{linear_state_update.1} parent=0
    #allocation2 [shape = 'u8[4096]{0}', space=vmem, size = 0x1000, scoped, tag = 'output window, operand 0, single buffered']
    #allocation3 [shape = 's32[1]{0}', space=sflag, size = 0x4, scoped, tag = 'scoped memory for linear_state_update.1']
    %8 = vsyncpa [#allocation3], 0
    // Predicated region
    $region2: #{linear_state_update.1} parent=1 // pred_check
      _
    $region3: #{linear_state_update.1} parent=1 // pred_check_branch
      %10 = sbr.rel (0) target = $region5
    $region4: #{linear_state_update.1} parent=1 // pred_region
      _
    $region5: #{linear_state_update.1} parent=1 // pred_fallthru
      _
    // Predicated region
    $region6: #{linear_state_update.1} parent=1 // pred_check
      _
    $region7: #{linear_state_update.1} parent=1 // pred_check_branch
      %12 = sbr.rel (0) target = $region9
    $region8: #{linear_state_update.1} parent=1 // pred_region
      _
    $region9: #{linear_state_update.1} parent=1 // pred_fallthru
      _
    // Predicated region
    $region10: #{linear_state_update.1} parent=1 // pred_check
      _
    $region11: #{linear_state_update.1} parent=1 // pred_check_branch
      %14 = sbr.rel (0) target = $region13
    $region12: #{linear_state_update.1} parent=1 // pred_region
      _
    $region13: #{linear_state_update.1} parent=1 // pred_fallthru
      _
    %v15 = vld [vmem:[%s0] sm:$0xff]
    %v16 = vld [vmem:[%s1] sm:$0xff]
    %18 = vrot.lane.b32.xlu0 %v16, 32
    %v19 = vpop.permute.xlu0 %18
    %vm21 = vcmask 261120
    %v22 = vsel %vm21, %v15, %v19
    %v23 = vld [vmem:[%s2] sm:$0xff]
    %v24 = vld [vmem:[%s2 + $0x8] sm:$0xff]
    %v25 = vld [vmem:[%s2 + $0x10] sm:$0xff]
    %v26 = vld [vmem:[%s2 + $0x18] sm:$0xff]
    %v27 = vld [vmem:[%s2 + $0x20] sm:$0xff]
    %v28 = vld [vmem:[%s2 + $0x28] sm:$0xff]
    %vm29 = vcmask 392192
    %v31 = vsel %vm29, %v22, 0
    %33 = vmatprep.subr.mxu0 0.0
    %34 = vmatpush1.msra.mxu0 %v23
    %35 = vmatprep.subr.mxu0 0.0
    %36 = vmatpush1.msra.mxu0 %v24
    %37 = vmatprep.subr.mxu0 0.0
    %38 = vmatpush1.msra.mxu0 %v25
    %39 = vmatprep.subr.mxu0 0.0
    %40 = vmatpush1.msra.mxu0 %v26
    %41 = vmatprep.subr.mxu0 0.0
    %42 = vmatpush1.msra.mxu0 %v27
    %43 = vmatprep.subr.mxu0 0.0
    %44 = vmatpush1.msra.mxu0 %v28
    %45 = vmatprep.subr.mxu0 0.0
    %46 = vmatpush1.msra.mxu0 0.0
    %47 = vmatprep.subr.mxu0 0.0
    %48 = vmatpush1.msra.mxu0 0.0
    %49 = vmatprep.subr.mxu0 0.0
    %50 = vmatpush1.msra.mxu0 0.0
    %51 = vmatprep.subr.mxu0 0.0
    %52 = vmatpush1.msra.mxu0 0.0
    %53 = vmatprep.subr.mxu0 0.0
    %54 = vmatpush1.msra.mxu0 0.0
    %55 = vmatprep.subr.mxu0 0.0
    %56 = vmatpush1.msra.mxu0 0.0
    %57 = vmatprep.subr.mxu0 0.0
    %58 = vmatpush1.msra.mxu0 0.0
    %59 = vmatprep.subr.mxu0 0.0
    %60 = vmatpush1.msra.mxu0 0.0
    %61 = vmatprep.subr.mxu0 0.0
    %62 = vmatpush1.msra.mxu0 0.0
    %63 = vmatprep.subr.mxu0 0.0
    %64 = vmatpush1.msra.mxu0 0.0
    %65 = vmatprep.subr.mxu0 0.0
    %66 = vmatpush1.msra.mxu0 0.0
    %67 = vmatprep.subr.mxu0 0.0
    %68 = vmatpush1.msra.mxu0 0.0
    %69 = vmatprep.subr.mxu0 0.0
    %70 = vmatpush1.msra.mxu0 0.0
    %71 = vmatprep.subr.mxu0 0.0
    %72 = vmatpush1.msra.mxu0 0.0
    %73 = vmatprep.subr.mxu0 0.0
    %74 = vmatpush1.msra.mxu0 0.0
    %75 = vmatprep.subr.mxu0 0.0
    %76 = vmatpush1.msra.mxu0 0.0
    %77 = vmatprep.subr.mxu0 0.0
    %78 = vmatpush1.msra.mxu0 0.0
    %79 = vmatprep.subr.mxu0 0.0
    %80 = vmatpush1.msra.mxu0 0.0
    %81 = vmatprep.subr.mxu0 0.0
    %82 = vmatpush1.msra.mxu0 0.0
    %83 = vmatprep.subr.mxu0 0.0
    %84 = vmatpush1.msra.mxu0 0.0
    %85 = vmatprep.subr.mxu0 0.0
    %86 = vmatpush1.msra.mxu0 0.0
    %87 = vmatprep.subr.mxu0 0.0
    %88 = vmatpush1.msra.mxu0 0.0
    %89 = vmatprep.subr.mxu0 0.0
    %90 = vmatpush1.msra.mxu0 0.0
    %91 = vmatprep.subr.mxu0 0.0
    %92 = vmatpush1.msra.mxu0 0.0
    %93 = vmatprep.subr.mxu0 0.0
    %94 = vmatpush1.msra.mxu0 0.0
    %95 = vmatprep.subr.mxu0 0.0
    %96 = vmatpush1.msra.mxu0 0.0
    %97 = vmatprep.mubr.f32.mxu0 0.0
    %98 = vmatmul.mubr.f32.gmra.mrb[0].mxu0 %v31
    %v99 = vpop.f32.mrb[0].mxu0
    %v100 = vadd.f32 0.0, %v99
    %v101 = vpop.f32.mrb[0].mxu0
    %102 = vdwg.mxu0
    %103 = vst.msk [vmem:[#allocation2] sm:$0xff] %vm21, %v100
    // Predicated region
    $region14: #{linear_state_update.1} parent=1 // pred_check
      _
    $region15: #{linear_state_update.1} parent=1 // pred_check_branch
      %105 = sbr.rel (0) target = $region17
    $region16: #{linear_state_update.1} parent=1 // pred_region
      %s107 = ssub.s32 128, 128
      %108 = vsyncadd [#allocation3], %s107
      %s110 = sshll.u32 [#allocation2], 4
      %s111 = int_to_ptr.vmem [resolvable:$true] %s110
      %113 = dma.vmem_to_hbm [thread:$0]  %s111, 128, %s3, [#allocation3]
    $region17: #{linear_state_update.1} parent=1 // pred_fallthru
      _
    // Predicated region
    $region18: #{linear_state_update.1} parent=1 // pred_check
      _
    $region19: #{linear_state_update.1} parent=1 // pred_check_branch
      %115 = sbr.rel (0) target = $region21
    $region20: #{linear_state_update.1} parent=1 // pred_region
      %116 = dma.done [#allocation3], 128
    $region21: #{linear_state_update.1} parent=1 // pred_fallthru
      _
    %117 = vsyncpa [#allocation3], 1

</llo_original>
